<compile_context>
chip_gen: v7x
topology: tpu7x:2x2x1
jax: 0.10.0
libtpu: 0.0.40
codegen_flags: <defaults>
</compile_context>

<pallas_src>
import jax
import jax.numpy as jnp
from jax.experimental import pallas as pl
from jax.experimental.pallas import tpu as pltpu

HIDDEN = 100
HID_PAD = 128
IN_FEATURES = 132
IN_PAD = 256
OUT_FEATURES = 7
OUT_PAD = 128
BN_EPS = 1e-5


# ---------------------------------------------------------------------------
# Kernel
# ---------------------------------------------------------------------------
def net1_kernel(x_ref, w0_ref, w_ref, v_ref, o_ref):
    """Whole forward pass fused; everything resident in VMEM (no grid)."""

    def row(i):
        # one packed (1, 128) parameter vector (bias / gamma / beta)
        return v_ref[i:i + 1, :]

    def bn_relu(h, gamma, beta):
        # Two independent batch-axis reductions (can overlap on the XLU),
        # then a single fused scale/shift + ReLU over the (B, 128) tile.
        mean = jnp.mean(h, axis=0, keepdims=True)
        mean_sq = jnp.mean(h * h, axis=0, keepdims=True)
        var = mean_sq - mean * mean
        scale = gamma * jax.lax.rsqrt(var + BN_EPS)
        shift = beta - mean * scale
        return jnp.maximum(h * scale + shift, 0.0)

    # block 0: Linear(132->100) + BN + ReLU   (padded 256 -> 128)
    h = jnp.dot(x_ref[...].astype(jnp.bfloat16), w0_ref[...],
                preferred_element_type=jnp.float32) + row(0)
    h = bn_relu(h, row(1), row(2))

    # blocks 1..4: Linear(100->100) + BN + ReLU   (padded 128 -> 128)
    for l in range(4):
        r = 3 * (l + 1)
        h = jnp.dot(h.astype(jnp.bfloat16), w_ref[l],
                    preferred_element_type=jnp.float32) + row(r)
        h = bn_relu(h, row(r + 1), row(r + 2))

    # final Linear(100->7)   (padded 128 -> 128; real outputs in lanes 0..6)
    h = jnp.dot(h.astype(jnp.bfloat16), w_ref[4],
                preferred_element_type=jnp.float32) + row(15)

    o_ref[...] = h.astype(o_ref.dtype)


# ---------------------------------------------------------------------------
# Wrapper
# ---------------------------------------------------------------------------
@jax.jit
def net1_forward(x, w0p, w_stack, vecs):
    B = x.shape[0]
    # pad input features to a lane-dense 256 width (zeros contribute nothing)
    xp = jnp.zeros((B, IN_PAD), jnp.float32).at[:, :IN_FEATURES].set(x)
    vmem = pl.BlockSpec(memory_space=pltpu.MemorySpace.VMEM)
    out = pl.pallas_call(
        net1_kernel,
        out_shape=jax.ShapeDtypeStruct((B, OUT_PAD), jnp.float32),
        in_specs=[vmem, vmem, vmem, vmem],
        out_specs=vmem,
    )(xp, w0p, w_stack, vecs)
    return out[:, :OUT_FEATURES]


# ---------------------------------------------------------------------------
# Parameter init (logical, unpadded) and packing (padded, lane-dense)
# ---------------------------------------------------------------------------
def init_params(key):
    """Deterministic init matching Net1.__init__ shapes.

    Linear weights stored as (in, out); biases / BN params as (1, out).
    Returns the flat 'logical' parameter list.
    """
    dims = [
        (IN_FEATURES, HIDDEN),
        (HIDDEN, HIDDEN),
        (HIDDEN, HIDDEN),
        (HIDDEN, HIDDEN),
        (HIDDEN, HIDDEN),
        (HIDDEN, OUT_FEATURES),
    ]
    params = []
    keys = jax.random.split(key, 2 * len(dims))
    for i, (fan_in, fan_out) in enumerate(dims):
        bound = 1.0 / jnp.sqrt(fan_in)
        w = jax.random.uniform(keys[2 * i], (fan_in, fan_out), jnp.float32,
                               -bound, bound)
        b = jax.random.uniform(keys[2 * i + 1], (1, fan_out), jnp.float32,
                               -bound, bound)
        params.append(w)
        params.append(b)
        if i < len(dims) - 1:  # BatchNorm1d after every layer but the last
            params.append(jnp.ones((1, fan_out), jnp.float32))   # gamma
            params.append(jnp.zeros((1, fan_out), jnp.float32))  # beta
    return params


def pack_params(params):
    """Pack logical params into 3 padded, lane-dense kernel operands."""
    def setvec(vecs, r, v, n):
        return vecs.at[r, :n].set(v.reshape(-1))

    # layer 0
    w0, b0, g0, be0 = params[0:4]
    w0p = (jnp.zeros((IN_PAD, HID_PAD), jnp.bfloat16)
           .at[:IN_FEATURES, :HIDDEN].set(w0.astype(jnp.bfloat16)))

    w_stack = jnp.zeros((5, HID_PAD, HID_PAD), jnp.bfloat16)
    vecs = jnp.zeros((16, HID_PAD), jnp.float32)
    vecs = setvec(vecs, 0, b0, HIDDEN)
    vecs = setvec(vecs, 1, g0, HIDDEN)
    vecs = setvec(vecs, 2, be0, HIDDEN)

    idx = 4
    for l in range(4):  # hidden layers 1..4
        w, b, g, be = params[idx:idx + 4]
        idx += 4
        w_stack = w_stack.at[l, :HIDDEN, :HIDDEN].set(w.astype(jnp.bfloat16))
        r = 3 * (l + 1)
        vecs = setvec(vecs, r, b, HIDDEN)
        vecs = setvec(vecs, r + 1, g, HIDDEN)
        vecs = setvec(vecs, r + 2, be, HIDDEN)

    w5, b5 = params[idx:idx + 2]  # final layer
    w_stack = w_stack.at[4, :HIDDEN, :OUT_FEATURES].set(w5.astype(jnp.bfloat16))
    vecs = setvec(vecs, 15, b5, OUT_FEATURES)
    return w0p, w_stack, vecs


# ---------------------------------------------------------------------------
# Pure-JAX reference (mirrors the kernel's bf16-matmul / f32-accumulate path)
# ---------------------------------------------------------------------------
def net1_reference(x, params):
    h = x
    idx = 0
    for layer in range(6):
        w = params[idx]
        b = params[idx + 1]
        idx += 2
        h = jnp.dot(h.astype(jnp.bfloat16), w.astype(jnp.bfloat16),
                    preferred_element_type=jnp.float32) + b
        if layer < 5:
            g = params[idx]
            be = params[idx + 1]
            idx += 2
            mean = jnp.mean(h, axis=0, keepdims=True)
            var = jnp.mean((h - mean) ** 2, axis=0, keepdims=True)
            h = g * (h - mean) * jax.lax.rsqrt(var + BN_EPS) + be
            h = jnp.maximum(h, 0.0)
    return h


if __name__ == "__main__":
    key = jax.random.PRNGKey(0)
    kx, kp = jax.random.split(key)

    B = 8  # BatchNorm1d training semantics require B > 1
    x = jax.random.normal(kx, (B, IN_FEATURES), jnp.float32)

    params = init_params(kp)
    w0p, w_stack, vecs = pack_params(params)

    out = net1_forward(x, w0p, w_stack, vecs)
    out = jax.block_until_ready(out)

    ref = net1_reference(x, params)
    assert out.shape == (B, OUT_FEATURES), out.shape
    max_err = float(jnp.max(jnp.abs(out - ref)))
    assert jnp.allclose(out, ref, atol=2e-3, rtol=2e-3), max_err

    print("KERNEL_OK")
</pallas_src>

<mosaic_0001>
module attributes {stable_mosaic.version = 11 : i64} {
  func.func @net1_kernel(%arg0: memref<8x256xf32, #tpu.memory_space<vmem>>, %arg1: memref<256x128xbf16, #tpu.memory_space<vmem>>, %arg2: memref<5x128x128xbf16, #tpu.memory_space<vmem>>, %arg3: memref<16x128xf32, #tpu.memory_space<vmem>>, %arg4: memref<8x128xf32, #tpu.memory_space<vmem>>) attributes {dimension_semantics = [], scalar_prefetch = 0 : i64, scratch_operands = 0 : i64, tpu.core_type = #tpu.core_type<tc>} {
    %c0 = arith.constant 0 : index
    %c0_0 = arith.constant 0 : index
    %0 = vector.load %arg0[%c0, %c0_0] : memref<8x256xf32, #tpu.memory_space<vmem>>, vector<8x256xf32>
    %1 = arith.truncf %0 : vector<8x256xf32> to vector<8x256xbf16>
    %c0_1 = arith.constant 0 : index
    %c0_2 = arith.constant 0 : index
    %2 = vector.load %arg1[%c0_1, %c0_2] : memref<256x128xbf16, #tpu.memory_space<vmem>>, vector<256x128xbf16>
    %cst = arith.constant dense<0.000000e+00> : vector<8x128xf32>
    %3 = tpu.matmul %1, %2, %cst {dimension_numbers = #tpu.dot_dimension_numbers<[1], [0], [0], [1], [0, 0, 1, 1], [], []>} : vector<8x256xbf16>, vector<256x128xbf16>, vector<8x128xf32> -> vector<8x128xf32>
    %c0_3 = arith.constant 0 : index
    %c0_4 = arith.constant 0 : index
    %4 = vector.load %arg3[%c0_3, %c0_4] : memref<16x128xf32, #tpu.memory_space<vmem>>, vector<1x128xf32>
    %5 = vector.broadcast %4 : vector<1x128xf32> to vector<8x128xf32>
    %6 = arith.addf %3, %5 : vector<8x128xf32>
    %c1 = arith.constant 1 : index
    %c0_5 = arith.constant 0 : index
    %7 = vector.load %arg3[%c1, %c0_5] : memref<16x128xf32, #tpu.memory_space<vmem>>, vector<1x128xf32>
    %c2 = arith.constant 2 : index
    %c0_6 = arith.constant 0 : index
    %8 = vector.load %arg3[%c2, %c0_6] : memref<16x128xf32, #tpu.memory_space<vmem>>, vector<1x128xf32>
    %cst_7 = arith.constant dense<0.000000e+00> : vector<128xf32>
    %9 = vector.multi_reduction <add>, %6, %cst_7 [0] : vector<8x128xf32> to vector<128xf32>
    %10 = vector.shape_cast %9 : vector<128xf32> to vector<1x128xf32>
    %cst_8 = arith.constant 8.000000e+00 : f32
    %11 = vector.broadcast %cst_8 : f32 to vector<1x128xf32>
    %12 = arith.divf %10, %11 : vector<1x128xf32>
    %13 = arith.mulf %6, %6 : vector<8x128xf32>
    %cst_9 = arith.constant dense<0.000000e+00> : vector<128xf32>
    %14 = vector.multi_reduction <add>, %13, %cst_9 [0] : vector<8x128xf32> to vector<128xf32>
    %15 = vector.shape_cast %14 : vector<128xf32> to vector<1x128xf32>
    %cst_10 = arith.constant 8.000000e+00 : f32
    %16 = vector.broadcast %cst_10 : f32 to vector<1x128xf32>
    %17 = arith.divf %15, %16 : vector<1x128xf32>
    %18 = arith.mulf %12, %12 : vector<1x128xf32>
    %19 = arith.subf %17, %18 : vector<1x128xf32>
    %cst_11 = arith.constant 9.99999974E-6 : f32
    %20 = vector.broadcast %cst_11 : f32 to vector<1x128xf32>
    %21 = arith.addf %19, %20 : vector<1x128xf32>
    %22 = math.rsqrt %21 : vector<1x128xf32>
    %23 = arith.mulf %7, %22 : vector<1x128xf32>
    %24 = arith.mulf %12, %23 : vector<1x128xf32>
    %25 = arith.subf %8, %24 : vector<1x128xf32>
    %26 = vector.broadcast %23 : vector<1x128xf32> to vector<8x128xf32>
    %27 = arith.mulf %6, %26 : vector<8x128xf32>
    %28 = vector.broadcast %25 : vector<1x128xf32> to vector<8x128xf32>
    %29 = arith.addf %27, %28 : vector<8x128xf32>
    %cst_12 = arith.constant 0.000000e+00 : f32
    %30 = vector.broadcast %cst_12 : f32 to vector<8x128xf32>
    %31 = arith.maximumf %29, %30 : vector<8x128xf32>
    %32 = arith.truncf %31 : vector<8x128xf32> to vector<8x128xbf16>
    %c0_13 = arith.constant 0 : index
    %c0_14 = arith.constant 0 : index
    %c0_15 = arith.constant 0 : index
    %33 = vector.load %arg2[%c0_13, %c0_14, %c0_15] : memref<5x128x128xbf16, #tpu.memory_space<vmem>>, vector<1x128x128xbf16>
    %34 = vector.shape_cast %33 : vector<1x128x128xbf16> to vector<128x128xbf16>
    %cst_16 = arith.constant dense<0.000000e+00> : vector<8x128xf32>
    %35 = tpu.matmul %32, %34, %cst_16 {dimension_numbers = #tpu.dot_dimension_numbers<[1], [0], [0], [1], [0, 0, 1, 1], [], []>} : vector<8x128xbf16>, vector<128x128xbf16>, vector<8x128xf32> -> vector<8x128xf32>
    %c3 = arith.constant 3 : index
    %c0_17 = arith.constant 0 : index
    %36 = vector.load %arg3[%c3, %c0_17] : memref<16x128xf32, #tpu.memory_space<vmem>>, vector<1x128xf32>
    %37 = vector.broadcast %36 : vector<1x128xf32> to vector<8x128xf32>
    %38 = arith.addf %35, %37 : vector<8x128xf32>
    %c4 = arith.constant 4 : index
    %c0_18 = arith.constant 0 : index
    %39 = vector.load %arg3[%c4, %c0_18] : memref<16x128xf32, #tpu.memory_space<vmem>>, vector<1x128xf32>
    %c5 = arith.constant 5 : index
    %c0_19 = arith.constant 0 : index
    %40 = vector.load %arg3[%c5, %c0_19] : memref<16x128xf32, #tpu.memory_space<vmem>>, vector<1x128xf32>
    %cst_20 = arith.constant dense<0.000000e+00> : vector<128xf32>
    %41 = vector.multi_reduction <add>, %38, %cst_20 [0] : vector<8x128xf32> to vector<128xf32>
    %42 = vector.shape_cast %41 : vector<128xf32> to vector<1x128xf32>
    %cst_21 = arith.constant 8.000000e+00 : f32
    %43 = vector.broadcast %cst_21 : f32 to vector<1x128xf32>
    %44 = arith.divf %42, %43 : vector<1x128xf32>
    %45 = arith.mulf %38, %38 : vector<8x128xf32>
    %cst_22 = arith.constant dense<0.000000e+00> : vector<128xf32>
    %46 = vector.multi_reduction <add>, %45, %cst_22 [0] : vector<8x128xf32> to vector<128xf32>
    %47 = vector.shape_cast %46 : vector<128xf32> to vector<1x128xf32>
    %cst_23 = arith.constant 8.000000e+00 : f32
    %48 = vector.broadcast %cst_23 : f32 to vector<1x128xf32>
    %49 = arith.divf %47, %48 : vector<1x128xf32>
    %50 = arith.mulf %44, %44 : vector<1x128xf32>
    %51 = arith.subf %49, %50 : vector<1x128xf32>
    %cst_24 = arith.constant 9.99999974E-6 : f32
    %52 = vector.broadcast %cst_24 : f32 to vector<1x128xf32>
    %53 = arith.addf %51, %52 : vector<1x128xf32>
    %54 = math.rsqrt %53 : vector<1x128xf32>
    %55 = arith.mulf %39, %54 : vector<1x128xf32>
    %56 = arith.mulf %44, %55 : vector<1x128xf32>
    %57 = arith.subf %40, %56 : vector<1x128xf32>
    %58 = vector.broadcast %55 : vector<1x128xf32> to vector<8x128xf32>
    %59 = arith.mulf %38, %58 : vector<8x128xf32>
    %60 = vector.broadcast %57 : vector<1x128xf32> to vector<8x128xf32>
    %61 = arith.addf %59, %60 : vector<8x128xf32>
    %cst_25 = arith.constant 0.000000e+00 : f32
    %62 = vector.broadcast %cst_25 : f32 to vector<8x128xf32>
    %63 = arith.maximumf %61, %62 : vector<8x128xf32>
    %64 = arith.truncf %63 : vector<8x128xf32> to vector<8x128xbf16>
    %c1_26 = arith.constant 1 : index
    %c0_27 = arith.constant 0 : index
    %c0_28 = arith.constant 0 : index
    %65 = vector.load %arg2[%c1_26, %c0_27, %c0_28] : memref<5x128x128xbf16, #tpu.memory_space<vmem>>, vector<1x128x128xbf16>
    %66 = vector.shape_cast %65 : vector<1x128x128xbf16> to vector<128x128xbf16>
    %cst_29 = arith.constant dense<0.000000e+00> : vector<8x128xf32>
    %67 = tpu.matmul %64, %66, %cst_29 {dimension_numbers = #tpu.dot_dimension_numbers<[1], [0], [0], [1], [0, 0, 1, 1], [], []>} : vector<8x128xbf16>, vector<128x128xbf16>, vector<8x128xf32> -> vector<8x128xf32>
    %c6 = arith.constant 6 : index
    %c0_30 = arith.constant 0 : index
    %68 = vector.load %arg3[%c6, %c0_30] : memref<16x128xf32, #tpu.memory_space<vmem>>, vector<1x128xf32>
    %69 = vector.broadcast %68 : vector<1x128xf32> to vector<8x128xf32>
    %70 = arith.addf %67, %69 : vector<8x128xf32>
    %c7 = arith.constant 7 : index
    %c0_31 = arith.constant 0 : index
    %71 = vector.load %arg3[%c7, %c0_31] : memref<16x128xf32, #tpu.memory_space<vmem>>, vector<1x128xf32>
    %c8 = arith.constant 8 : index
    %c0_32 = arith.constant 0 : index
    %72 = vector.load %arg3[%c8, %c0_32] : memref<16x128xf32, #tpu.memory_space<vmem>>, vector<1x128xf32>
    %cst_33 = arith.constant dense<0.000000e+00> : vector<128xf32>
    %73 = vector.multi_reduction <add>, %70, %cst_33 [0] : vector<8x128xf32> to vector<128xf32>
    %74 = vector.shape_cast %73 : vector<128xf32> to vector<1x128xf32>
    %cst_34 = arith.constant 8.000000e+00 : f32
    %75 = vector.broadcast %cst_34 : f32 to vector<1x128xf32>
    %76 = arith.divf %74, %75 : vector<1x128xf32>
    %77 = arith.mulf %70, %70 : vector<8x128xf32>
    %cst_35 = arith.constant dense<0.000000e+00> : vector<128xf32>
    %78 = vector.multi_reduction <add>, %77, %cst_35 [0] : vector<8x128xf32> to vector<128xf32>
    %79 = vector.shape_cast %78 : vector<128xf32> to vector<1x128xf32>
    %cst_36 = arith.constant 8.000000e+00 : f32
    %80 = vector.broadcast %cst_36 : f32 to vector<1x128xf32>
    %81 = arith.divf %79, %80 : vector<1x128xf32>
    %82 = arith.mulf %76, %76 : vector<1x128xf32>
    %83 = arith.subf %81, %82 : vector<1x128xf32>
    %cst_37 = arith.constant 9.99999974E-6 : f32
    %84 = vector.broadcast %cst_37 : f32 to vector<1x128xf32>
    %85 = arith.addf %83, %84 : vector<1x128xf32>
    %86 = math.rsqrt %85 : vector<1x128xf32>
    %87 = arith.mulf %71, %86 : vector<1x128xf32>
    %88 = arith.mulf %76, %87 : vector<1x128xf32>
    %89 = arith.subf %72, %88 : vector<1x128xf32>
    %90 = vector.broadcast %87 : vector<1x128xf32> to vector<8x128xf32>
    %91 = arith.mulf %70, %90 : vector<8x128xf32>
    %92 = vector.broadcast %89 : vector<1x128xf32> to vector<8x128xf32>
    %93 = arith.addf %91, %92 : vector<8x128xf32>
    %cst_38 = arith.constant 0.000000e+00 : f32
    %94 = vector.broadcast %cst_38 : f32 to vector<8x128xf32>
    %95 = arith.maximumf %93, %94 : vector<8x128xf32>
    %96 = arith.truncf %95 : vector<8x128xf32> to vector<8x128xbf16>
    %c2_39 = arith.constant 2 : index
    %c0_40 = arith.constant 0 : index
    %c0_41 = arith.constant 0 : index
    %97 = vector.load %arg2[%c2_39, %c0_40, %c0_41] : memref<5x128x128xbf16, #tpu.memory_space<vmem>>, vector<1x128x128xbf16>
    %98 = vector.shape_cast %97 : vector<1x128x128xbf16> to vector<128x128xbf16>
    %cst_42 = arith.constant dense<0.000000e+00> : vector<8x128xf32>
    %99 = tpu.matmul %96, %98, %cst_42 {dimension_numbers = #tpu.dot_dimension_numbers<[1], [0], [0], [1], [0, 0, 1, 1], [], []>} : vector<8x128xbf16>, vector<128x128xbf16>, vector<8x128xf32> -> vector<8x128xf32>
    %c9 = arith.constant 9 : index
    %c0_43 = arith.constant 0 : index
    %100 = vector.load %arg3[%c9, %c0_43] : memref<16x128xf32, #tpu.memory_space<vmem>>, vector<1x128xf32>
    %101 = vector.broadcast %100 : vector<1x128xf32> to vector<8x128xf32>
    %102 = arith.addf %99, %101 : vector<8x128xf32>
    %c10 = arith.constant 10 : index
    %c0_44 = arith.constant 0 : index
    %103 = vector.load %arg3[%c10, %c0_44] : memref<16x128xf32, #tpu.memory_space<vmem>>, vector<1x128xf32>
    %c11 = arith.constant 11 : index
    %c0_45 = arith.constant 0 : index
    %104 = vector.load %arg3[%c11, %c0_45] : memref<16x128xf32, #tpu.memory_space<vmem>>, vector<1x128xf32>
    %cst_46 = arith.constant dense<0.000000e+00> : vector<128xf32>
    %105 = vector.multi_reduction <add>, %102, %cst_46 [0] : vector<8x128xf32> to vector<128xf32>
    %106 = vector.shape_cast %105 : vector<128xf32> to vector<1x128xf32>
    %cst_47 = arith.constant 8.000000e+00 : f32
    %107 = vector.broadcast %cst_47 : f32 to vector<1x128xf32>
    %108 = arith.divf %106, %107 : vector<1x128xf32>
    %109 = arith.mulf %102, %102 : vector<8x128xf32>
    %cst_48 = arith.constant dense<0.000000e+00> : vector<128xf32>
    %110 = vector.multi_reduction <add>, %109, %cst_48 [0] : vector<8x128xf32> to vector<128xf32>
    %111 = vector.shape_cast %110 : vector<128xf32> to vector<1x128xf32>
    %cst_49 = arith.constant 8.000000e+00 : f32
    %112 = vector.broadcast %cst_49 : f32 to vector<1x128xf32>
    %113 = arith.divf %111, %112 : vector<1x128xf32>
    %114 = arith.mulf %108, %108 : vector<1x128xf32>
    %115 = arith.subf %113, %114 : vector<1x128xf32>
    %cst_50 = arith.constant 9.99999974E-6 : f32
    %116 = vector.broadcast %cst_50 : f32 to vector<1x128xf32>
    %117 = arith.addf %115, %116 : vector<1x128xf32>
    %118 = math.rsqrt %117 : vector<1x128xf32>
    %119 = arith.mulf %103, %118 : vector<1x128xf32>
    %120 = arith.mulf %108, %119 : vector<1x128xf32>
    %121 = arith.subf %104, %120 : vector<1x128xf32>
    %122 = vector.broadcast %119 : vector<1x128xf32> to vector<8x128xf32>
    %123 = arith.mulf %102, %122 : vector<8x128xf32>
    %124 = vector.broadcast %121 : vector<1x128xf32> to vector<8x128xf32>
    %125 = arith.addf %123, %124 : vector<8x128xf32>
    %cst_51 = arith.constant 0.000000e+00 : f32
    %126 = vector.broadcast %cst_51 : f32 to vector<8x128xf32>
    %127 = arith.maximumf %125, %126 : vector<8x128xf32>
    %128 = arith.truncf %127 : vector<8x128xf32> to vector<8x128xbf16>
    %c3_52 = arith.constant 3 : index
    %c0_53 = arith.constant 0 : index
    %c0_54 = arith.constant 0 : index
    %129 = vector.load %arg2[%c3_52, %c0_53, %c0_54] : memref<5x128x128xbf16, #tpu.memory_space<vmem>>, vector<1x128x128xbf16>
    %130 = vector.shape_cast %129 : vector<1x128x128xbf16> to vector<128x128xbf16>
    %cst_55 = arith.constant dense<0.000000e+00> : vector<8x128xf32>
    %131 = tpu.matmul %128, %130, %cst_55 {dimension_numbers = #tpu.dot_dimension_numbers<[1], [0], [0], [1], [0, 0, 1, 1], [], []>} : vector<8x128xbf16>, vector<128x128xbf16>, vector<8x128xf32> -> vector<8x128xf32>
    %c12 = arith.constant 12 : index
    %c0_56 = arith.constant 0 : index
    %132 = vector.load %arg3[%c12, %c0_56] : memref<16x128xf32, #tpu.memory_space<vmem>>, vector<1x128xf32>
    %133 = vector.broadcast %132 : vector<1x128xf32> to vector<8x128xf32>
    %134 = arith.addf %131, %133 : vector<8x128xf32>
    %c13 = arith.constant 13 : index
    %c0_57 = arith.constant 0 : index
    %135 = vector.load %arg3[%c13, %c0_57] : memref<16x128xf32, #tpu.memory_space<vmem>>, vector<1x128xf32>
    %c14 = arith.constant 14 : index
    %c0_58 = arith.constant 0 : index
    %136 = vector.load %arg3[%c14, %c0_58] : memref<16x128xf32, #tpu.memory_space<vmem>>, vector<1x128xf32>
    %cst_59 = arith.constant dense<0.000000e+00> : vector<128xf32>
    %137 = vector.multi_reduction <add>, %134, %cst_59 [0] : vector<8x128xf32> to vector<128xf32>
    %138 = vector.shape_cast %137 : vector<128xf32> to vector<1x128xf32>
    %cst_60 = arith.constant 8.000000e+00 : f32
    %139 = vector.broadcast %cst_60 : f32 to vector<1x128xf32>
    %140 = arith.divf %138, %139 : vector<1x128xf32>
    %141 = arith.mulf %134, %134 : vector<8x128xf32>
    %cst_61 = arith.constant dense<0.000000e+00> : vector<128xf32>
    %142 = vector.multi_reduction <add>, %141, %cst_61 [0] : vector<8x128xf32> to vector<128xf32>
    %143 = vector.shape_cast %142 : vector<128xf32> to vector<1x128xf32>
    %cst_62 = arith.constant 8.000000e+00 : f32
    %144 = vector.broadcast %cst_62 : f32 to vector<1x128xf32>
    %145 = arith.divf %143, %144 : vector<1x128xf32>
    %146 = arith.mulf %140, %140 : vector<1x128xf32>
    %147 = arith.subf %145, %146 : vector<1x128xf32>
    %cst_63 = arith.constant 9.99999974E-6 : f32
    %148 = vector.broadcast %cst_63 : f32 to vector<1x128xf32>
    %149 = arith.addf %147, %148 : vector<1x128xf32>
    %150 = math.rsqrt %149 : vector<1x128xf32>
    %151 = arith.mulf %135, %150 : vector<1x128xf32>
    %152 = arith.mulf %140, %151 : vector<1x128xf32>
    %153 = arith.subf %136, %152 : vector<1x128xf32>
    %154 = vector.broadcast %151 : vector<1x128xf32> to vector<8x128xf32>
    %155 = arith.mulf %134, %154 : vector<8x128xf32>
    %156 = vector.broadcast %153 : vector<1x128xf32> to vector<8x128xf32>
    %157 = arith.addf %155, %156 : vector<8x128xf32>
    %cst_64 = arith.constant 0.000000e+00 : f32
    %158 = vector.broadcast %cst_64 : f32 to vector<8x128xf32>
    %159 = arith.maximumf %157, %158 : vector<8x128xf32>
    %160 = arith.truncf %159 : vector<8x128xf32> to vector<8x128xbf16>
    %c4_65 = arith.constant 4 : index
    %c0_66 = arith.constant 0 : index
    %c0_67 = arith.constant 0 : index
    %161 = vector.load %arg2[%c4_65, %c0_66, %c0_67] : memref<5x128x128xbf16, #tpu.memory_space<vmem>>, vector<1x128x128xbf16>
    %162 = vector.shape_cast %161 : vector<1x128x128xbf16> to vector<128x128xbf16>
    %cst_68 = arith.constant dense<0.000000e+00> : vector<8x128xf32>
    %163 = tpu.matmul %160, %162, %cst_68 {dimension_numbers = #tpu.dot_dimension_numbers<[1], [0], [0], [1], [0, 0, 1, 1], [], []>} : vector<8x128xbf16>, vector<128x128xbf16>, vector<8x128xf32> -> vector<8x128xf32>
    %c15 = arith.constant 15 : index
    %c0_69 = arith.constant 0 : index
    %164 = vector.load %arg3[%c15, %c0_69] : memref<16x128xf32, #tpu.memory_space<vmem>>, vector<1x128xf32>
    %165 = vector.broadcast %164 : vector<1x128xf32> to vector<8x128xf32>
    %166 = arith.addf %163, %165 : vector<8x128xf32>
    %c0_70 = arith.constant 0 : index
    %c0_71 = arith.constant 0 : index
    %167 = vector.load %arg4[%c0_70, %c0_71] : memref<8x128xf32, #tpu.memory_space<vmem>>, vector<8x128xf32>
    tpu.vector_store %arg4[%c0_70, %c0_71], %166 {strides = array<i32>} : memref<8x128xf32, #tpu.memory_space<vmem>>, vector<8x128xf32>,
    return
  }
}

</mosaic_0001>

<llo_original>
// kernel: net1_forward.1
$region0: #{net1_forward.1}
  #allocation0 [shape = 'u32[]', space=smem, size = 0x4, offset = 0x4, fixed_abs, tag = 'smem constant byte address 0x4 - core index']
  #allocation1 [shape = 'u32[144,128]{1,0:T(1,128)}', space=vmem, size = 0x12000, scoped, tag = 'internal scratch']
  %s0 = inlined_call_operand.vmem [shape: f32[8,256], index: 0, kind: input, shape index: {}]
  %s1 = inlined_call_operand.hbm [shape: bf16[256,128], index: 1, kind: input, shape index: {}]
  %s2 = inlined_call_operand.hbm [shape: bf16[5,128,128], index: 2, kind: input, shape index: {}]
  %s3 = inlined_call_operand.vmem [shape: f32[16,128], index: 3, kind: input, shape index: {}]
  %s4 = inlined_call_operand.hbm [shape: f32[8,128], index: 4, kind: output, shape index: {}]
  %s5 = sld [smem:[#allocation0]]
  $region34: #{net1_forward.1} parent=0
    _
  %s7 = ssub.s32 1, %s5
  %s8 = scalar_select 0, %s7, %s5
  $region1: #{net1_forward.1} parent=0
    #allocation2 [shape = 'u8[65536]{0}', space=vmem, size = 0x10000, scoped, tag = 'input window, operand 1, single buffered']
    #allocation3 [shape = 's32[1]{0}', space=sflag, size = 0x4, scoped, tag = 'scoped memory for net1_forward.1']
    #allocation4 [shape = 's32[1]{0}', space=sflag, size = 0x4, scoped, tag = 'scoped memory for net1_forward.1']
    #allocation5 [shape = 'u8[163840]{0}', space=vmem, size = 0x28000, scoped, tag = 'input window, operand 2, single buffered']
    #allocation6 [shape = 's32[1]{0}', space=sflag, size = 0x4, scoped, tag = 'scoped memory for net1_forward.1']
    #allocation7 [shape = 'u8[4096]{0}', space=vmem, size = 0x1000, scoped, tag = 'output window, operand 0, single buffered']
    %9 = vsyncpa [#allocation3], 0
    %10 = vsyncpa [#allocation6], 0
    %11 = vsyncpa [#allocation4], 0
    // Predicated region
    $region2: #{net1_forward.1} parent=1 // pred_check
      _
    $region3: #{net1_forward.1} parent=1 // pred_check_branch
      %13 = sbr.rel (0) target = $region5
    $region4: #{net1_forward.1} parent=1 // pred_region
      _
    $region5: #{net1_forward.1} parent=1 // pred_fallthru
      _
    // Predicated region
    $region6: #{net1_forward.1} parent=1 // pred_check
      _
    $region7: #{net1_forward.1} parent=1 // pred_check_branch
      %15 = sbr.rel (0) target = $region9
    $region8: #{net1_forward.1} parent=1 // pred_region
      %s17 = ssub.s32 2048, 2048
      %18 = vsyncadd [#allocation3], %s17
      %s19 = sshll.u32 [#allocation2], 4
      %s20 = int_to_ptr.vmem [resolvable:$true] %s19
      %25 = dma.hbm_to_vmem [thread:$0]  %s1, 2048, %s20, [#allocation3], 64, 64, 4
    $region9: #{net1_forward.1} parent=1 // pred_fallthru
      _
    // Predicated region
    $region10: #{net1_forward.1} parent=1 // pred_check
      _
    $region11: #{net1_forward.1} parent=1 // pred_check_branch
      %27 = sbr.rel (0) target = $region13
    $region12: #{net1_forward.1} parent=1 // pred_region
      %s29 = ssub.s32 5120, 5120
      %30 = vsyncadd [#allocation6], %s29
      %s31 = sshll.u32 [#allocation5], 4
      %s32 = int_to_ptr.vmem [resolvable:$true] %s31
      %37 = dma.hbm_to_vmem [thread:$0]  %s2, 5120, %s32, [#allocation6], 64, 64, 4
    $region13: #{net1_forward.1} parent=1 // pred_fallthru
      _
    // Predicated region
    $region14: #{net1_forward.1} parent=1 // pred_check
      _
    $region15: #{net1_forward.1} parent=1 // pred_check_branch
      %39 = sbr.rel (0) target = $region17
    $region16: #{net1_forward.1} parent=1 // pred_region
      _
    $region17: #{net1_forward.1} parent=1 // pred_fallthru
      _
    // Predicated region
    $region18: #{net1_forward.1} parent=1 // pred_check
      _
    $region19: #{net1_forward.1} parent=1 // pred_check_branch
      %41 = sbr.rel (0) target = $region21
    $region20: #{net1_forward.1} parent=1 // pred_region
      %42 = dma.done [#allocation3], 2048
    $region21: #{net1_forward.1} parent=1 // pred_fallthru
      _
    // Predicated region
    $region22: #{net1_forward.1} parent=1 // pred_check
      _
    $region23: #{net1_forward.1} parent=1 // pred_check_branch
      %44 = sbr.rel (0) target = $region25
    $region24: #{net1_forward.1} parent=1 // pred_region
      %45 = dma.done [#allocation6], 5120
    $region25: #{net1_forward.1} parent=1 // pred_fallthru
      _
    %v47 = vld [vmem:[%s0] sm:$0xff]
    %v48 = vld [vmem:[%s0 + $0x8] sm:$0xff]
    %v49 = vpack.c.bf16 %v47, %v47
    %v50 = vpack.c.bf16 %v48, %v48
    %v51 = vld [vmem:[#allocation2] sm:$0xf]
    %v52 = vld [vmem:[#allocation2 + $0x4] sm:$0xf]
    %v53 = vld [vmem:[#allocation2 + $0x8] sm:$0xf]
    %v54 = vld [vmem:[#allocation2 + $0xc] sm:$0xf]
    %v55 = vld [vmem:[#allocation2 + $0x10] sm:$0xf]
    %v56 = vld [vmem:[#allocation2 + $0x14] sm:$0xf]
    %v57 = vld [vmem:[#allocation2 + $0x18] sm:$0xf]
    %v58 = vld [vmem:[#allocation2 + $0x1c] sm:$0xf]
    %v59 = vld [vmem:[#allocation2 + $0x20] sm:$0xf]
    %v60 = vld [vmem:[#allocation2 + $0x24] sm:$0xf]
    %v61 = vld [vmem:[#allocation2 + $0x28] sm:$0xf]
    %v62 = vld [vmem:[#allocation2 + $0x2c] sm:$0xf]
    %v63 = vld [vmem:[#allocation2 + $0x30] sm:$0xf]
    %v64 = vld [vmem:[#allocation2 + $0x34] sm:$0xf]
    %v65 = vld [vmem:[#allocation2 + $0x38] sm:$0xf]
    %v66 = vld [vmem:[#allocation2 + $0x3c] sm:$0xf]
    %v67 = vld [vmem:[#allocation2 + $0x40] sm:$0xf]
    %v68 = vld [vmem:[#allocation2 + $0x44] sm:$0xf]
    %v69 = vld [vmem:[#allocation2 + $0x48] sm:$0xf]
    %v70 = vld [vmem:[#allocation2 + $0x4c] sm:$0xf]
    %v71 = vld [vmem:[#allocation2 + $0x50] sm:$0xf]
    %v72 = vld [vmem:[#allocation2 + $0x54] sm:$0xf]
    %v73 = vld [vmem:[#allocation2 + $0x58] sm:$0xf]
    %v74 = vld [vmem:[#allocation2 + $0x5c] sm:$0xf]
    %v75 = vld [vmem:[#allocation2 + $0x60] sm:$0xf]
    %v76 = vld [vmem:[#allocation2 + $0x64] sm:$0xf]
    %v77 = vld [vmem:[#allocation2 + $0x68] sm:$0xf]
    %v78 = vld [vmem:[#allocation2 + $0x6c] sm:$0xf]
    %v79 = vld [vmem:[#allocation2 + $0x70] sm:$0xf]
    %v80 = vld [vmem:[#allocation2 + $0x74] sm:$0xf]
    %v81 = vld [vmem:[#allocation2 + $0x78] sm:$0xf]
    %v82 = vld [vmem:[#allocation2 + $0x7c] sm:$0xf]
    %v83 = vld [vmem:[%s3] sm:$0x1]
    %v84 = vlaneseq
    %v85 = vshrl.u32 %v84, 7
    %v86 = vsub.s32 0, %v85
    %v87 = vrot.slane %v83, %v86
    %v120 = vunpack.c.l.b16 %v51
    %v121 = vunpack.c.l.b16 %v52
    %v122 = vunpack.c.l.b16 %v53
    %v123 = vunpack.c.l.b16 %v54
    %v124 = vunpack.c.l.b16 %v55
    %v125 = vunpack.c.l.b16 %v56
    %v126 = vunpack.c.l.b16 %v57
    %v127 = vunpack.c.l.b16 %v58
    %v128 = vunpack.c.l.b16 %v59
    %v129 = vunpack.c.l.b16 %v60
    %v130 = vunpack.c.l.b16 %v61
    %v131 = vunpack.c.l.b16 %v62
    %v132 = vunpack.c.l.b16 %v63
    %v133 = vunpack.c.l.b16 %v64
    %v134 = vunpack.c.l.b16 %v65
    %v135 = vunpack.c.l.b16 %v66
    %v136 = vunpack.c.l.b16 %v67
    %v137 = vunpack.c.l.b16 %v68
    %v138 = vunpack.c.l.b16 %v69
    %v139 = vunpack.c.l.b16 %v70
    %v140 = vunpack.c.l.b16 %v71
    %v141 = vunpack.c.l.b16 %v72
    %v142 = vunpack.c.l.b16 %v73
    %v143 = vunpack.c.l.b16 %v74
    %v144 = vunpack.c.l.b16 %v75
    %v145 = vunpack.c.l.b16 %v76
    %v146 = vunpack.c.l.b16 %v77
    %v147 = vunpack.c.l.b16 %v78
    %v148 = vunpack.c.l.b16 %v79
    %v149 = vunpack.c.l.b16 %v80
    %v150 = vunpack.c.l.b16 %v81
    %v151 = vunpack.c.l.b16 %v82
    %v152 = vpack.c.b16 %v121, %v120
    %v153 = vpack.c.b16 %v123, %v122
    %v154 = vpack.c.b16 %v125, %v124
    %v155 = vpack.c.b16 %v127, %v126
    %v156 = vpack.c.b16 %v129, %v128
    %v157 = vpack.c.b16 %v131, %v130
    %v158 = vpack.c.b16 %v133, %v132
    %v159 = vpack.c.b16 %v135, %v134
    %v160 = vpack.c.b16 %v137, %v136
    %v161 = vpack.c.b16 %v139, %v138
    %v162 = vpack.c.b16 %v141, %v140
    %v163 = vpack.c.b16 %v143, %v142
    %v164 = vpack.c.b16 %v145, %v144
    %v165 = vpack.c.b16 %v147, %v146
    %v166 = vpack.c.b16 %v149, %v148
    %v167 = vpack.c.b16 %v151, %v150
    %184 = vmatprep.subr.bf16.mxu0 0
    %185 = vmatpush1.bf16.msra.mxu0 %v152
    %186 = vmatprep.subr.bf16.mxu0 0
    %187 = vmatpush1.bf16.msra.mxu0 %v153
    %188 = vmatprep.subr.bf16.mxu0 0
    %189 = vmatpush1.bf16.msra.mxu0 %v154
    %190 = vmatprep.subr.bf16.mxu0 0
    %191 = vmatpush1.bf16.msra.mxu0 %v155
    %192 = vmatprep.subr.bf16.mxu0 0
    %193 = vmatpush1.bf16.msra.mxu0 %v156
    %194 = vmatprep.subr.bf16.mxu0 0
    %195 = vmatpush1.bf16.msra.mxu0 %v157
    %196 = vmatprep.subr.bf16.mxu0 0
    %197 = vmatpush1.bf16.msra.mxu0 %v158
    %198 = vmatprep.subr.bf16.mxu0 0
    %199 = vmatpush1.bf16.msra.mxu0 %v159
    %200 = vmatprep.subr.bf16.mxu0 0
    %201 = vmatpush1.bf16.msra.mxu0 %v160
    %202 = vmatprep.subr.bf16.mxu0 0
    %203 = vmatpush1.bf16.msra.mxu0 %v161
    %204 = vmatprep.subr.bf16.mxu0 0
    %205 = vmatpush1.bf16.msra.mxu0 %v162
    %206 = vmatprep.subr.bf16.mxu0 0
    %207 = vmatpush1.bf16.msra.mxu0 %v163
    %208 = vmatprep.subr.bf16.mxu0 0
    %209 = vmatpush1.bf16.msra.mxu0 %v164
    %210 = vmatprep.subr.bf16.mxu0 0
    %211 = vmatpush1.bf16.msra.mxu0 %v165
    %212 = vmatprep.subr.bf16.mxu0 0
    %213 = vmatpush1.bf16.msra.mxu0 %v166
    %214 = vmatprep.subr.bf16.mxu0 0
    %215 = vmatpush1.bf16.msra.mxu0 %v167
    %216 = vmatprep.mubr.bf16.mxu0 %v50
    %217 = vmatmul.mubr.bf16.gmra.mrb[0].mxu0 %v49
    %v218 = vpop.f32.mrb[0].mxu0
    %v219 = vadd.f32 %v87, %v218
    %v220 = vpop.f32.mrb[0].mxu0
    %v221 = vpop.f32.mrb[0].mxu0
    %v222 = vpop.f32.mrb[0].mxu0
    %223 = vdwg.mxu0
    %v224 = vld [vmem:[%s3 + $0x1] sm:$0x1]
    %v225 = vld [vmem:[%s3 + $0x2] sm:$0x1]
    %v226 = vrot.slane %v219, 4
    %v227 = vadd.f32 %v219, %v226
    %v228 = vrot.slane %v227, 2
    %v229 = vadd.f32 %v227, %v228
    %v230 = vrot.slane %v229, 1
    %v231 = vadd.f32 %v229, %v230
    %v232 = vrcp.pop 8.0
    %v233 = vmul.f32 %v231, %v232
    %v234 = vmul.f32 %v219, %v219
    %v235 = vrot.slane %v234, 4
    %v236 = vadd.f32 %v234, %v235
    %v237 = vrot.slane %v236, 2
    %v238 = vadd.f32 %v236, %v237
    %v239 = vrot.slane %v238, 1
    %v240 = vadd.f32 %v238, %v239
    %v241 = vmul.f32 %v240, %v232
    %v242 = vmul.f32 %v233, %v233
    %v243 = vsub.f32 %v241, %v242
    %v244 = vadd.f32 %v243, 1e-05
    %v245 = vrsqrt.pop %v244
    %v246 = vmul.f32 %v224, %v245
    %v247 = vmul.f32 %v233, %v246
    %v248 = vsub.f32 %v225, %v247
    %v249 = vlaneseq
    %v250 = vshrl.u32 %v249, 7
    %v251 = vsub.s32 0, %v250
    %v252 = vrot.slane %v246, %v251
    %v253 = vmul.f32 %v219, %v252
    %v254 = vlaneseq
    %v255 = vshrl.u32 %v254, 7
    %v256 = vsub.s32 0, %v255
    %v257 = vrot.slane %v248, %v256
    %v258 = vadd.f32 %v253, %v257
    %v259 = vmax.f32 %v258, 0.0
    %v260 = vpack.c.bf16 %v259, %v259
    %v261 = vld [vmem:[#allocation5] sm:$0xf]
    %v262 = vld [vmem:[#allocation5 + $0x4] sm:$0xf]
    %v263 = vld [vmem:[#allocation5 + $0x8] sm:$0xf]
    %v264 = vld [vmem:[#allocation5 + $0xc] sm:$0xf]
    %v265 = vld [vmem:[#allocation5 + $0x10] sm:$0xf]
    %v266 = vld [vmem:[#allocation5 + $0x14] sm:$0xf]
    %v267 = vld [vmem:[#allocation5 + $0x18] sm:$0xf]
    %v268 = vld [vmem:[#allocation5 + $0x1c] sm:$0xf]
    %v269 = vld [vmem:[#allocation5 + $0x20] sm:$0xf]
    %v270 = vld [vmem:[#allocation5 + $0x24] sm:$0xf]
    %v271 = vld [vmem:[#allocation5 + $0x28] sm:$0xf]
    %v272 = vld [vmem:[#allocation5 + $0x2c] sm:$0xf]
    %v273 = vld [vmem:[#allocation5 + $0x30] sm:$0xf]
    %v274 = vld [vmem:[#allocation5 + $0x34] sm:$0xf]
    %v275 = vld [vmem:[#allocation5 + $0x38] sm:$0xf]
    %v276 = vld [vmem:[#allocation5 + $0x3c] sm:$0xf]
    %v277 = vld [vmem:[%s3 + $0x3] sm:$0x1]
    %v278 = vlaneseq
    %v279 = vshrl.u32 %v278, 7
    %v280 = vsub.s32 0, %v279
    %v281 = vrot.slane %v277, %v280
    %v298 = vunpack.c.l.b16 %v261
    %v299 = vunpack.c.l.b16 %v262
    %v300 = vunpack.c.l.b16 %v263
    %v301 = vunpack.c.l.b16 %v264
    %v302 = vunpack.c.l.b16 %v265
    %v303 = vunpack.c.l.b16 %v266
    %v304 = vunpack.c.l.b16 %v267
    %v305 = vunpack.c.l.b16 %v268
    %v306 = vunpack.c.l.b16 %v269
    %v307 = vunpack.c.l.b16 %v270
    %v308 = vunpack.c.l.b16 %v271
    %v309 = vunpack.c.l.b16 %v272
    %v310 = vunpack.c.l.b16 %v273
    %v311 = vunpack.c.l.b16 %v274
    %v312 = vunpack.c.l.b16 %v275
    %v313 = vunpack.c.l.b16 %v276
    %v314 = vpack.c.b16 %v299, %v298
    %v315 = vpack.c.b16 %v301, %v300
    %v316 = vpack.c.b16 %v303, %v302
    %v317 = vpack.c.b16 %v305, %v304
    %v318 = vpack.c.b16 %v307, %v306
    %v319 = vpack.c.b16 %v309, %v308
    %v320 = vpack.c.b16 %v311, %v310
    %v321 = vpack.c.b16 %v313, %v312
    %330 = vmatprep.subr.bf16.mxu0 0
    %331 = vmatpush1.bf16.msra.mxu0 %v314
    %332 = vmatprep.subr.bf16.mxu0 0
    %333 = vmatpush1.bf16.msra.mxu0 %v315
    %334 = vmatprep.subr.bf16.mxu0 0
    %335 = vmatpush1.bf16.msra.mxu0 %v316
    %336 = vmatprep.subr.bf16.mxu0 0
    %337 = vmatpush1.bf16.msra.mxu0 %v317
    %338 = vmatprep.subr.bf16.mxu0 0
    %339 = vmatpush1.bf16.msra.mxu0 %v318
    %340 = vmatprep.subr.bf16.mxu0 0
    %341 = vmatpush1.bf16.msra.mxu0 %v319
    %342 = vmatprep.subr.bf16.mxu0 0
    %343 = vmatpush1.bf16.msra.mxu0 %v320
    %344 = vmatprep.subr.bf16.mxu0 0
    %345 = vmatpush1.bf16.msra.mxu0 %v321
    %346 = vmatprep.subr.bf16.mxu0 0
    %347 = vmatpush1.bf16.msra.mxu0 0
    %348 = vmatprep.subr.bf16.mxu0 0
    %349 = vmatpush1.bf16.msra.mxu0 0
    %350 = vmatprep.subr.bf16.mxu0 0
    %351 = vmatpush1.bf16.msra.mxu0 0
    %352 = vmatprep.subr.bf16.mxu0 0
    %353 = vmatpush1.bf16.msra.mxu0 0
    %354 = vmatprep.subr.bf16.mxu0 0
    %355 = vmatpush1.bf16.msra.mxu0 0
    %356 = vmatprep.subr.bf16.mxu0 0
    %357 = vmatpush1.bf16.msra.mxu0 0
    %358 = vmatprep.subr.bf16.mxu0 0
    %359 = vmatpush1.bf16.msra.mxu0 0
    %360 = vmatprep.subr.bf16.mxu0 0
    %361 = vmatpush1.bf16.msra.mxu0 0
    %362 = vmatprep.mubr.bf16.mxu0 0
    %363 = vmatmul.mubr.bf16.gmra.mrb[0].mxu0 %v260
    %v364 = vpop.f32.mrb[0].mxu0
    %v365 = vadd.f32 %v281, %v364
    %v366 = vpop.f32.mrb[0].mxu0
    %v367 = vpop.f32.mrb[0].mxu0
    %v368 = vpop.f32.mrb[0].mxu0
    %369 = vdwg.mxu0
    %v370 = vld [vmem:[%s3 + $0x4] sm:$0x1]
    %v371 = vld [vmem:[%s3 + $0x5] sm:$0x1]
    %v372 = vrot.slane %v365, 4
    %v373 = vadd.f32 %v365, %v372
    %v374 = vrot.slane %v373, 2
    %v375 = vadd.f32 %v373, %v374
    %v376 = vrot.slane %v375, 1
    %v377 = vadd.f32 %v375, %v376
    %v378 = vmul.f32 %v377, %v232
    %v379 = vmul.f32 %v365, %v365
    %v380 = vrot.slane %v379, 4
    %v381 = vadd.f32 %v379, %v380
    %v382 = vrot.slane %v381, 2
    %v383 = vadd.f32 %v381, %v382
    %v384 = vrot.slane %v383, 1
    %v385 = vadd.f32 %v383, %v384
    %v386 = vmul.f32 %v385, %v232
    %v387 = vmul.f32 %v378, %v378
    %v388 = vsub.f32 %v386, %v387
    %v389 = vadd.f32 %v388, 1e-05
    %v390 = vrsqrt.pop %v389
    %v391 = vmul.f32 %v370, %v390
    %v392 = vmul.f32 %v378, %v391
    %v393 = vsub.f32 %v371, %v392
    %v394 = vlaneseq
    %v395 = vshrl.u32 %v394, 7
    %v396 = vsub.s32 0, %v395
    %v397 = vrot.slane %v391, %v396
    %v398 = vmul.f32 %v365, %v397
    %v399 = vlaneseq
    %v400 = vshrl.u32 %v399, 7
    %v401 = vsub.s32 0, %v400
    %v402 = vrot.slane %v393, %v401
    %v403 = vadd.f32 %v398, %v402
    %v404 = vmax.f32 %v403, 0.0
    %v405 = vpack.c.bf16 %v404, %v404
    %s406 = scalar_lea.vmem [#allocation5], 64
    %v407 = vld [vmem:[%s406] sm:$0xf]
    %v408 = vld [vmem:[%s406 + $0x4] sm:$0xf]
    %v409 = vld [vmem:[%s406 + $0x8] sm:$0xf]
    %v410 = vld [vmem:[%s406 + $0xc] sm:$0xf]
    %v411 = vld [vmem:[%s406 + $0x10] sm:$0xf]
    %v412 = vld [vmem:[%s406 + $0x14] sm:$0xf]
    %v413 = vld [vmem:[%s406 + $0x18] sm:$0xf]
    %v414 = vld [vmem:[%s406 + $0x1c] sm:$0xf]
    %v415 = vld [vmem:[%s406 + $0x20] sm:$0xf]
    %v416 = vld [vmem:[%s406 + $0x24] sm:$0xf]
    %v417 = vld [vmem:[%s406 + $0x28] sm:$0xf]
    %v418 = vld [vmem:[%s406 + $0x2c] sm:$0xf]
    %v419 = vld [vmem:[%s406 + $0x30] sm:$0xf]
    %v420 = vld [vmem:[%s406 + $0x34] sm:$0xf]
    %v421 = vld [vmem:[%s406 + $0x38] sm:$0xf]
    %v422 = vld [vmem:[%s406 + $0x3c] sm:$0xf]
    %v423 = vld [vmem:[%s3 + $0x6] sm:$0x1]
    %v424 = vlaneseq
    %v425 = vshrl.u32 %v424, 7
    %v426 = vsub.s32 0, %v425
    %v427 = vrot.slane %v423, %v426
    %v444 = vunpack.c.l.b16 %v407
    %v445 = vunpack.c.l.b16 %v408
    %v446 = vunpack.c.l.b16 %v409
    %v447 = vunpack.c.l.b16 %v410
    %v448 = vunpack.c.l.b16 %v411
    %v449 = vunpack.c.l.b16 %v412
    %v450 = vunpack.c.l.b16 %v413
    %v451 = vunpack.c.l.b16 %v414
    %v452 = vunpack.c.l.b16 %v415
    %v453 = vunpack.c.l.b16 %v416
    %v454 = vunpack.c.l.b16 %v417
    %v455 = vunpack.c.l.b16 %v418
    %v456 = vunpack.c.l.b16 %v419
    %v457 = vunpack.c.l.b16 %v420
    %v458 = vunpack.c.l.b16 %v421
    %v459 = vunpack.c.l.b16 %v422
    %v460 = vpack.c.b16 %v445, %v444
    %v461 = vpack.c.b16 %v447, %v446
    %v462 = vpack.c.b16 %v449, %v448
    %v463 = vpack.c.b16 %v451, %v450
    %v464 = vpack.c.b16 %v453, %v452
    %v465 = vpack.c.b16 %v455, %v454
    %v466 = vpack.c.b16 %v457, %v456
    %v467 = vpack.c.b16 %v459, %v458
    %476 = vmatprep.subr.bf16.mxu0 0
    %477 = vmatpush1.bf16.msra.mxu0 %v460
    %478 = vmatprep.subr.bf16.mxu0 0
    %479 = vmatpush1.bf16.msra.mxu0 %v461
    %480 = vmatprep.subr.bf16.mxu0 0
    %481 = vmatpush1.bf16.msra.mxu0 %v462
    %482 = vmatprep.subr.bf16.mxu0 0
    %483 = vmatpush1.bf16.msra.mxu0 %v463
    %484 = vmatprep.subr.bf16.mxu0 0
    %485 = vmatpush1.bf16.msra.mxu0 %v464
    %486 = vmatprep.subr.bf16.mxu0 0
    %487 = vmatpush1.bf16.msra.mxu0 %v465
    %488 = vmatprep.subr.bf16.mxu0 0
    %489 = vmatpush1.bf16.msra.mxu0 %v466
    %490 = vmatprep.subr.bf16.mxu0 0
    %491 = vmatpush1.bf16.msra.mxu0 %v467
    %492 = vmatprep.subr.bf16.mxu0 0
    %493 = vmatpush1.bf16.msra.mxu0 0
    %494 = vmatprep.subr.bf16.mxu0 0
    %495 = vmatpush1.bf16.msra.mxu0 0
    %496 = vmatprep.subr.bf16.mxu0 0
    %497 = vmatpush1.bf16.msra.mxu0 0
    %498 = vmatprep.subr.bf16.mxu0 0
    %499 = vmatpush1.bf16.msra.mxu0 0
    %500 = vmatprep.subr.bf16.mxu0 0
    %501 = vmatpush1.bf16.msra.mxu0 0
    %502 = vmatprep.subr.bf16.mxu0 0
    %503 = vmatpush1.bf16.msra.mxu0 0
    %504 = vmatprep.subr.bf16.mxu0 0
    %505 = vmatpush1.bf16.msra.mxu0 0
    %506 = vmatprep.subr.bf16.mxu0 0
    %507 = vmatpush1.bf16.msra.mxu0 0
    %508 = vmatprep.mubr.bf16.mxu0 0
    %509 = vmatmul.mubr.bf16.gmra.mrb[0].mxu0 %v405
    %v510 = vpop.f32.mrb[0].mxu0
    %v511 = vadd.f32 %v427, %v510
    %v512 = vpop.f32.mrb[0].mxu0
    %v513 = vpop.f32.mrb[0].mxu0
    %v514 = vpop.f32.mrb[0].mxu0
    %515 = vdwg.mxu0
    %v516 = vld [vmem:[%s3 + $0x7] sm:$0x1]
    %v517 = vld [vmem:[%s3 + $0x8] sm:$0x1]
    %v518 = vrot.slane %v511, 4
    %v519 = vadd.f32 %v511, %v518
    %v520 = vrot.slane %v519, 2
    %v521 = vadd.f32 %v519, %v520
    %v522 = vrot.slane %v521, 1
    %v523 = vadd.f32 %v521, %v522
    %v524 = vmul.f32 %v523, %v232
    %v525 = vmul.f32 %v511, %v511
    %v526 = vrot.slane %v525, 4
    %v527 = vadd.f32 %v525, %v526
    %v528 = vrot.slane %v527, 2
    %v529 = vadd.f32 %v527, %v528
    %v530 = vrot.slane %v529, 1
    %v531 = vadd.f32 %v529, %v530
    %v532 = vmul.f32 %v531, %v232
    %v533 = vmul.f32 %v524, %v524
    %v534 = vsub.f32 %v532, %v533
    %v535 = vadd.f32 %v534, 1e-05
    %v536 = vrsqrt.pop %v535
    %v537 = vmul.f32 %v516, %v536
    %v538 = vmul.f32 %v524, %v537
    %v539 = vsub.f32 %v517, %v538
    %v540 = vlaneseq
    %v541 = vshrl.u32 %v540, 7
    %v542 = vsub.s32 0, %v541
    %v543 = vrot.slane %v537, %v542
    %v544 = vmul.f32 %v511, %v543
    %v545 = vlaneseq
    %v546 = vshrl.u32 %v545, 7
    %v547 = vsub.s32 0, %v546
    %v548 = vrot.slane %v539, %v547
    %v549 = vadd.f32 %v544, %v548
    %v550 = vmax.f32 %v549, 0.0
    %v551 = vpack.c.bf16 %v550, %v550
    %s552 = scalar_lea.vmem [#allocation5], 128
    %v553 = vld [vmem:[%s552] sm:$0xf]
    %v554 = vld [vmem:[%s552 + $0x4] sm:$0xf]
    %v555 = vld [vmem:[%s552 + $0x8] sm:$0xf]
    %v556 = vld [vmem:[%s552 + $0xc] sm:$0xf]
    %v557 = vld [vmem:[%s552 + $0x10] sm:$0xf]
    %v558 = vld [vmem:[%s552 + $0x14] sm:$0xf]
    %v559 = vld [vmem:[%s552 + $0x18] sm:$0xf]
    %v560 = vld [vmem:[%s552 + $0x1c] sm:$0xf]
    %v561 = vld [vmem:[%s552 + $0x20] sm:$0xf]
    %v562 = vld [vmem:[%s552 + $0x24] sm:$0xf]
    %v563 = vld [vmem:[%s552 + $0x28] sm:$0xf]
    %v564 = vld [vmem:[%s552 + $0x2c] sm:$0xf]
    %v565 = vld [vmem:[%s552 + $0x30] sm:$0xf]
    %v566 = vld [vmem:[%s552 + $0x34] sm:$0xf]
    %v567 = vld [vmem:[%s552 + $0x38] sm:$0xf]
    %v568 = vld [vmem:[%s552 + $0x3c] sm:$0xf]
    %v569 = vld [vmem:[%s3 + $0x9] sm:$0x1]
    %v570 = vlaneseq
    %v571 = vshrl.u32 %v570, 7
    %v572 = vsub.s32 0, %v571
    %v573 = vrot.slane %v569, %v572
    %v590 = vunpack.c.l.b16 %v553
    %v591 = vunpack.c.l.b16 %v554
    %v592 = vunpack.c.l.b16 %v555
    %v593 = vunpack.c.l.b16 %v556
    %v594 = vunpack.c.l.b16 %v557
    %v595 = vunpack.c.l.b16 %v558
    %v596 = vunpack.c.l.b16 %v559
    %v597 = vunpack.c.l.b16 %v560
    %v598 = vunpack.c.l.b16 %v561
    %v599 = vunpack.c.l.b16 %v562
    %v600 = vunpack.c.l.b16 %v563
    %v601 = vunpack.c.l.b16 %v564
    %v602 = vunpack.c.l.b16 %v565
    %v603 = vunpack.c.l.b16 %v566
    %v604 = vunpack.c.l.b16 %v567
    %v605 = vunpack.c.l.b16 %v568
    %v606 = vpack.c.b16 %v591, %v590
    %v607 = vpack.c.b16 %v593, %v592
    %v608 = vpack.c.b16 %v595, %v594
    %v609 = vpack.c.b16 %v597, %v596
    %v610 = vpack.c.b16 %v599, %v598
    %v611 = vpack.c.b16 %v601, %v600
    %v612 = vpack.c.b16 %v603, %v602
    %v613 = vpack.c.b16 %v605, %v604
    %622 = vmatprep.subr.bf16.mxu0 0
    %623 = vmatpush1.bf16.msra.mxu0 %v606
    %624 = vmatprep.subr.bf16.mxu0 0
    %625 = vmatpush1.bf16.msra.mxu0 %v607
    %626 = vmatprep.subr.bf16.mxu0 0
    %627 = vmatpush1.bf16.msra.mxu0 %v608
    %628 = vmatprep.subr.bf16.mxu0 0
    %629 = vmatpush1.bf16.msra.mxu0 %v609
    %630 = vmatprep.subr.bf16.mxu0 0
    %631 = vmatpush1.bf16.msra.mxu0 %v610
    %632 = vmatprep.subr.bf16.mxu0 0
    %633 = vmatpush1.bf16.msra.mxu0 %v611
    %634 = vmatprep.subr.bf16.mxu0 0
    %635 = vmatpush1.bf16.msra.mxu0 %v612
    %636 = vmatprep.subr.bf16.mxu0 0
    %637 = vmatpush1.bf16.msra.mxu0 %v613
    %638 = vmatprep.subr.bf16.mxu0 0
    %639 = vmatpush1.bf16.msra.mxu0 0
    %640 = vmatprep.subr.bf16.mxu0 0
    %641 = vmatpush1.bf16.msra.mxu0 0
    %642 = vmatprep.subr.bf16.mxu0 0
    %643 = vmatpush1.bf16.msra.mxu0 0
    %644 = vmatprep.subr.bf16.mxu0 0
    %645 = vmatpush1.bf16.msra.mxu0 0
    %646 = vmatprep.subr.bf16.mxu0 0
    %647 = vmatpush1.bf16.msra.mxu0 0
    %648 = vmatprep.subr.bf16.mxu0 0
    %649 = vmatpush1.bf16.msra.mxu0 0
    %650 = vmatprep.subr.bf16.mxu0 0
    %651 = vmatpush1.bf16.msra.mxu0 0
    %652 = vmatprep.subr.bf16.mxu0 0
    %653 = vmatpush1.bf16.msra.mxu0 0
    %654 = vmatprep.mubr.bf16.mxu0 0
    %655 = vmatmul.mubr.bf16.gmra.mrb[0].mxu0 %v551
    %v656 = vpop.f32.mrb[0].mxu0
    %v657 = vadd.f32 %v573, %v656
    %v658 = vpop.f32.mrb[0].mxu0
    %v659 = vpop.f32.mrb[0].mxu0
    %v660 = vpop.f32.mrb[0].mxu0
    %661 = vdwg.mxu0
    %v662 = vld [vmem:[%s3 + $0xa] sm:$0x1]
    %v663 = vld [vmem:[%s3 + $0xb] sm:$0x1]
    %v664 = vrot.slane %v657, 4
    %v665 = vadd.f32 %v657, %v664
    %v666 = vrot.slane %v665, 2
    %v667 = vadd.f32 %v665, %v666
    %v668 = vrot.slane %v667, 1
    %v669 = vadd.f32 %v667, %v668
    %v670 = vmul.f32 %v669, %v232
    %v671 = vmul.f32 %v657, %v657
    %v672 = vrot.slane %v671, 4
    %v673 = vadd.f32 %v671, %v672
    %v674 = vrot.slane %v673, 2
    %v675 = vadd.f32 %v673, %v674
    %v676 = vrot.slane %v675, 1
    %v677 = vadd.f32 %v675, %v676
    %v678 = vmul.f32 %v677, %v232
    %v679 = vmul.f32 %v670, %v670
    %v680 = vsub.f32 %v678, %v679
    %v681 = vadd.f32 %v680, 1e-05
    %v682 = vrsqrt.pop %v681
    %v683 = vmul.f32 %v662, %v682
    %v684 = vmul.f32 %v670, %v683
    %v685 = vsub.f32 %v663, %v684
    %v686 = vlaneseq
    %v687 = vshrl.u32 %v686, 7
    %v688 = vsub.s32 0, %v687
    %v689 = vrot.slane %v683, %v688
    %v690 = vmul.f32 %v657, %v689
    %v691 = vlaneseq
    %v692 = vshrl.u32 %v691, 7
    %v693 = vsub.s32 0, %v692
    %v694 = vrot.slane %v685, %v693
    %v695 = vadd.f32 %v690, %v694
    %v696 = vmax.f32 %v695, 0.0
    %v697 = vpack.c.bf16 %v696, %v696
    %s698 = scalar_lea.vmem [#allocation5], 192
    %v699 = vld [vmem:[%s698] sm:$0xf]
    %v700 = vld [vmem:[%s698 + $0x4] sm:$0xf]
    %v701 = vld [vmem:[%s698 + $0x8] sm:$0xf]
    %v702 = vld [vmem:[%s698 + $0xc] sm:$0xf]
    %v703 = vld [vmem:[%s698 + $0x10] sm:$0xf]
    %v704 = vld [vmem:[%s698 + $0x14] sm:$0xf]
    %v705 = vld [vmem:[%s698 + $0x18] sm:$0xf]
    %v706 = vld [vmem:[%s698 + $0x1c] sm:$0xf]
    %v707 = vld [vmem:[%s698 + $0x20] sm:$0xf]
    %v708 = vld [vmem:[%s698 + $0x24] sm:$0xf]
    %v709 = vld [vmem:[%s698 + $0x28] sm:$0xf]
    %v710 = vld [vmem:[%s698 + $0x2c] sm:$0xf]
    %v711 = vld [vmem:[%s698 + $0x30] sm:$0xf]
    %v712 = vld [vmem:[%s698 + $0x34] sm:$0xf]
    %v713 = vld [vmem:[%s698 + $0x38] sm:$0xf]
    %v714 = vld [vmem:[%s698 + $0x3c] sm:$0xf]
    %v715 = vld [vmem:[%s3 + $0xc] sm:$0x1]
    %v716 = vlaneseq
    %v717 = vshrl.u32 %v716, 7
    %v718 = vsub.s32 0, %v717
    %v719 = vrot.slane %v715, %v718
    %v736 = vunpack.c.l.b16 %v699
    %v737 = vunpack.c.l.b16 %v700
    %v738 = vunpack.c.l.b16 %v701
    %v739 = vunpack.c.l.b16 %v702
    %v740 = vunpack.c.l.b16 %v703
    %v741 = vunpack.c.l.b16 %v704
    %v742 = vunpack.c.l.b16 %v705
    %v743 = vunpack.c.l.b16 %v706
    %v744 = vunpack.c.l.b16 %v707
    %v745 = vunpack.c.l.b16 %v708
    %v746 = vunpack.c.l.b16 %v709
    %v747 = vunpack.c.l.b16 %v710
    %v748 = vunpack.c.l.b16 %v711
    %v749 = vunpack.c.l.b16 %v712
    %v750 = vunpack.c.l.b16 %v713
    %v751 = vunpack.c.l.b16 %v714
    %v752 = vpack.c.b16 %v737, %v736
    %v753 = vpack.c.b16 %v739, %v738
    %v754 = vpack.c.b16 %v741, %v740
    %v755 = vpack.c.b16 %v743, %v742
    %v756 = vpack.c.b16 %v745, %v744
    %v757 = vpack.c.b16 %v747, %v746
    %v758 = vpack.c.b16 %v749, %v748
    %v759 = vpack.c.b16 %v751, %v750
    %768 = vmatprep.subr.bf16.mxu0 0
    %769 = vmatpush1.bf16.msra.mxu0 %v752
    %770 = vmatprep.subr.bf16.mxu0 0
    %771 = vmatpush1.bf16.msra.mxu0 %v753
    %772 = vmatprep.subr.bf16.mxu0 0
    %773 = vmatpush1.bf16.msra.mxu0 %v754
    %774 = vmatprep.subr.bf16.mxu0 0
    %775 = vmatpush1.bf16.msra.mxu0 %v755
    %776 = vmatprep.subr.bf16.mxu0 0
    %777 = vmatpush1.bf16.msra.mxu0 %v756
    %778 = vmatprep.subr.bf16.mxu0 0
    %779 = vmatpush1.bf16.msra.mxu0 %v757
    %780 = vmatprep.subr.bf16.mxu0 0
    %781 = vmatpush1.bf16.msra.mxu0 %v758
    %782 = vmatprep.subr.bf16.mxu0 0
    %783 = vmatpush1.bf16.msra.mxu0 %v759
    %784 = vmatprep.subr.bf16.mxu0 0
    %785 = vmatpush1.bf16.msra.mxu0 0
    %786 = vmatprep.subr.bf16.mxu0 0
    %787 = vmatpush1.bf16.msra.mxu0 0
    %788 = vmatprep.subr.bf16.mxu0 0
    %789 = vmatpush1.bf16.msra.mxu0 0
    %790 = vmatprep.subr.bf16.mxu0 0
    %791 = vmatpush1.bf16.msra.mxu0 0
    %792 = vmatprep.subr.bf16.mxu0 0
    %793 = vmatpush1.bf16.msra.mxu0 0
    %794 = vmatprep.subr.bf16.mxu0 0
    %795 = vmatpush1.bf16.msra.mxu0 0
    %796 = vmatprep.subr.bf16.mxu0 0
    %797 = vmatpush1.bf16.msra.mxu0 0
    %798 = vmatprep.subr.bf16.mxu0 0
    %799 = vmatpush1.bf16.msra.mxu0 0
    %800 = vmatprep.mubr.bf16.mxu0 0
    %801 = vmatmul.mubr.bf16.gmra.mrb[0].mxu0 %v697
    %v802 = vpop.f32.mrb[0].mxu0
    %v803 = vadd.f32 %v719, %v802
    %v804 = vpop.f32.mrb[0].mxu0
    %v805 = vpop.f32.mrb[0].mxu0
    %v806 = vpop.f32.mrb[0].mxu0
    %807 = vdwg.mxu0
    %v808 = vld [vmem:[%s3 + $0xd] sm:$0x1]
    %v809 = vld [vmem:[%s3 + $0xe] sm:$0x1]
    %v810 = vrot.slane %v803, 4
    %v811 = vadd.f32 %v803, %v810
    %v812 = vrot.slane %v811, 2
    %v813 = vadd.f32 %v811, %v812
    %v814 = vrot.slane %v813, 1
    %v815 = vadd.f32 %v813, %v814
    %v816 = vmul.f32 %v815, %v232
    %v817 = vmul.f32 %v803, %v803
    %v818 = vrot.slane %v817, 4
    %v819 = vadd.f32 %v817, %v818
    %v820 = vrot.slane %v819, 2
    %v821 = vadd.f32 %v819, %v820
    %v822 = vrot.slane %v821, 1
    %v823 = vadd.f32 %v821, %v822
    %v824 = vmul.f32 %v823, %v232
    %v825 = vmul.f32 %v816, %v816
    %v826 = vsub.f32 %v824, %v825
    %v827 = vadd.f32 %v826, 1e-05
    %v828 = vrsqrt.pop %v827
    %v829 = vmul.f32 %v808, %v828
    %v830 = vmul.f32 %v816, %v829
    %v831 = vsub.f32 %v809, %v830
    %v832 = vlaneseq
    %v833 = vshrl.u32 %v832, 7
    %v834 = vsub.s32 0, %v833
    %v835 = vrot.slane %v829, %v834
    %v836 = vmul.f32 %v803, %v835
    %v837 = vlaneseq
    %v838 = vshrl.u32 %v837, 7
    %v839 = vsub.s32 0, %v838
    %v840 = vrot.slane %v831, %v839
    %v841 = vadd.f32 %v836, %v840
    %v842 = vmax.f32 %v841, 0.0
    %v843 = vpack.c.bf16 %v842, %v842
    %s844 = scalar_lea.vmem [#allocation5], 256
    %v845 = vld [vmem:[%s844] sm:$0xf]
    %v846 = vld [vmem:[%s844 + $0x4] sm:$0xf]
    %v847 = vld [vmem:[%s844 + $0x8] sm:$0xf]
    %v848 = vld [vmem:[%s844 + $0xc] sm:$0xf]
    %v849 = vld [vmem:[%s844 + $0x10] sm:$0xf]
    %v850 = vld [vmem:[%s844 + $0x14] sm:$0xf]
    %v851 = vld [vmem:[%s844 + $0x18] sm:$0xf]
    %v852 = vld [vmem:[%s844 + $0x1c] sm:$0xf]
    %v853 = vld [vmem:[%s844 + $0x20] sm:$0xf]
    %v854 = vld [vmem:[%s844 + $0x24] sm:$0xf]
    %v855 = vld [vmem:[%s844 + $0x28] sm:$0xf]
    %v856 = vld [vmem:[%s844 + $0x2c] sm:$0xf]
    %v857 = vld [vmem:[%s844 + $0x30] sm:$0xf]
    %v858 = vld [vmem:[%s844 + $0x34] sm:$0xf]
    %v859 = vld [vmem:[%s844 + $0x38] sm:$0xf]
    %v860 = vld [vmem:[%s844 + $0x3c] sm:$0xf]
    %v861 = vld [vmem:[%s3 + $0xf] sm:$0x1]
    %v862 = vlaneseq
    %v863 = vshrl.u32 %v862, 7
    %v864 = vsub.s32 0, %v863
    %v865 = vrot.slane %v861, %v864
    %v882 = vunpack.c.l.b16 %v845
    %v883 = vunpack.c.l.b16 %v846
    %v884 = vunpack.c.l.b16 %v847
    %v885 = vunpack.c.l.b16 %v848
    %v886 = vunpack.c.l.b16 %v849
    %v887 = vunpack.c.l.b16 %v850
    %v888 = vunpack.c.l.b16 %v851
    %v889 = vunpack.c.l.b16 %v852
    %v890 = vunpack.c.l.b16 %v853
    %v891 = vunpack.c.l.b16 %v854
    %v892 = vunpack.c.l.b16 %v855
    %v893 = vunpack.c.l.b16 %v856
    %v894 = vunpack.c.l.b16 %v857
    %v895 = vunpack.c.l.b16 %v858
    %v896 = vunpack.c.l.b16 %v859
    %v897 = vunpack.c.l.b16 %v860
    %v898 = vpack.c.b16 %v883, %v882
    %v899 = vpack.c.b16 %v885, %v884
    %v900 = vpack.c.b16 %v887, %v886
    %v901 = vpack.c.b16 %v889, %v888
    %v902 = vpack.c.b16 %v891, %v890
    %v903 = vpack.c.b16 %v893, %v892
    %v904 = vpack.c.b16 %v895, %v894
    %v905 = vpack.c.b16 %v897, %v896
    %914 = vmatprep.subr.bf16.mxu0 0
    %915 = vmatpush1.bf16.msra.mxu0 %v898
    %916 = vmatprep.subr.bf16.mxu0 0
    %917 = vmatpush1.bf16.msra.mxu0 %v899
    %918 = vmatprep.subr.bf16.mxu0 0
    %919 = vmatpush1.bf16.msra.mxu0 %v900
    %920 = vmatprep.subr.bf16.mxu0 0
    %921 = vmatpush1.bf16.msra.mxu0 %v901
    %922 = vmatprep.subr.bf16.mxu0 0
    %923 = vmatpush1.bf16.msra.mxu0 %v902
    %924 = vmatprep.subr.bf16.mxu0 0
    %925 = vmatpush1.bf16.msra.mxu0 %v903
    %926 = vmatprep.subr.bf16.mxu0 0
    %927 = vmatpush1.bf16.msra.mxu0 %v904
    %928 = vmatprep.subr.bf16.mxu0 0
    %929 = vmatpush1.bf16.msra.mxu0 %v905
    %930 = vmatprep.subr.bf16.mxu0 0
    %931 = vmatpush1.bf16.msra.mxu0 0
    %932 = vmatprep.subr.bf16.mxu0 0
    %933 = vmatpush1.bf16.msra.mxu0 0
    %934 = vmatprep.subr.bf16.mxu0 0
    %935 = vmatpush1.bf16.msra.mxu0 0
    %936 = vmatprep.subr.bf16.mxu0 0
    %937 = vmatpush1.bf16.msra.mxu0 0
    %938 = vmatprep.subr.bf16.mxu0 0
    %939 = vmatpush1.bf16.msra.mxu0 0
    %940 = vmatprep.subr.bf16.mxu0 0
    %941 = vmatpush1.bf16.msra.mxu0 0
    %942 = vmatprep.subr.bf16.mxu0 0
    %943 = vmatpush1.bf16.msra.mxu0 0
    %944 = vmatprep.subr.bf16.mxu0 0
    %945 = vmatpush1.bf16.msra.mxu0 0
    %946 = vmatprep.mubr.bf16.mxu0 0
    %947 = vmatmul.mubr.bf16.gmra.mrb[0].mxu0 %v843
    %v948 = vpop.f32.mrb[0].mxu0
    %v949 = vadd.f32 %v865, %v948
    %v950 = vpop.f32.mrb[0].mxu0
    %v951 = vpop.f32.mrb[0].mxu0
    %v952 = vpop.f32.mrb[0].mxu0
    %953 = vdwg.mxu0
    %954 = vst [vmem:[#allocation7] sm:$0xff] %v949
    // Predicated region
    $region26: #{net1_forward.1} parent=1 // pred_check
      _
    $region27: #{net1_forward.1} parent=1 // pred_check_branch
      %956 = sbr.rel (0) target = $region29
    $region28: #{net1_forward.1} parent=1 // pred_region
      %s958 = ssub.s32 128, 128
      %959 = vsyncadd [#allocation4], %s958
      %s961 = sshll.u32 [#allocation7], 4
      %s962 = int_to_ptr.vmem [resolvable:$true] %s961
      %964 = dma.vmem_to_hbm [thread:$0]  %s962, 128, %s4, [#allocation4]
    $region29: #{net1_forward.1} parent=1 // pred_fallthru
      _
    // Predicated region
    $region30: #{net1_forward.1} parent=1 // pred_check
      _
    $region31: #{net1_forward.1} parent=1 // pred_check_branch
      %966 = sbr.rel (0) target = $region33
    $region32: #{net1_forward.1} parent=1 // pred_region
      %967 = dma.done [#allocation4], 128
    $region33: #{net1_forward.1} parent=1 // pred_fallthru
      _
    %968 = vsyncpa [#allocation3], 1
    %969 = vsyncpa [#allocation6], 1
    %970 = vsyncpa [#allocation4], 1

</llo_original>
